<compile_context>
chip_gen: v7x
topology: tpu7x:2x2x1
jax: 0.10.0
libtpu: 0.0.40
codegen_flags: <defaults>
</compile_context>

<pallas_src>
import functools

import jax
import jax.numpy as jnp
from jax import lax
from jax.experimental import pallas as pl
from jax.experimental.pallas import tpu as pltpu

EPS = 1e-5                        # nn.BatchNorm2d default eps
LANE = 128                        # TPU lane width
DEFAULT_PACKED_ROW_TILE = 1024    # tile in packed (lane-dense) rows
VMEM_LIMIT_BYTES = 32 * 1024 * 1024


def _round_up(x, m):
    return (x + m - 1) // m * m


# ---------------------------------------------------------------------------
# Single fused two-phase kernel.
#   phase 0 (p=0): y = patches @ W_blockdiag ; accumulate column sum / sumsq
#   phase 1 (p=1): step 0 folds the packed groups and builds scale/shift,
#                  every step recomputes y and writes relu(y*scale + shift).
# ---------------------------------------------------------------------------
def _fused_conv_bn_relu_kernel(patches_ref, w_ref, gb_ref, o_ref,
                               sum_ref, sq_ref, scale_ref, shift_ref,
                               *, inv_m, pack, c_out, eps):
    """patches_ref: (TPM, pack*K)  packed im2col rows (bf16/f32)
       w_ref:       (pack*K, CB)   block-diagonal conv weight (bf16/f32)
       gb_ref:      (2, CB)        row0 = gamma (tiled x pack), row1 = beta
       o_ref:       (TPM, CB)      packed relu(bn(conv(x))) output (f32)
       sum/sq_ref:  (1, CB)        per-(group, channel) batch-stat accumulators
       scale/shift_ref: (1, CB)    folded BN affine, built at phase 1 step 0
    """
    phase = pl.program_id(0)
    step = pl.program_id(1)

    @pl.when((phase == 0) & (step == 0))
    def _init():
        sum_ref[...] = jnp.zeros_like(sum_ref)
        sq_ref[...] = jnp.zeros_like(sq_ref)

    # (TPM, pack*K) x (pack*K, CB) on the MXU.  Recomputed in phase 1: both
    # phases are HBM-bound, so recompute is cheaper than a y round trip.
    y = jnp.dot(patches_ref[...], w_ref[...], preferred_element_type=jnp.float32)

    @pl.when(phase == 0)
    def _stats():
        sum_ref[...] += jnp.sum(y, axis=0, keepdims=True)
        sq_ref[...] += jnp.sum(y * y, axis=0, keepdims=True)

    @pl.when((phase == 1) & (step == 0))
    def _finalize():
        # Cyclic XLU roll by multiples of c_out folds the `pack` groups: every
        # lane ends up holding the TOTAL sum for its channel (lane % c_out),
        # already replicated across groups -> directly broadcastable below.
        s0 = sum_ref[...]
        q0 = sq_ref[...]
        s, q = s0, q0
        for g in range(1, pack):
            s = s + pltpu.roll(s0, g * c_out, axis=1)
            q = q + pltpu.roll(q0, g * c_out, axis=1)
        mean = s * inv_m
        # NOTE: E[y^2] - E[y]^2 can cancel when |mean| >> std; sums are kept
        # in f32 and it is well within the tolerance for this stage.
        var = jnp.maximum(q * inv_m - mean * mean, 0.0)
        scale = gb_ref[0:1, :] * lax.rsqrt(var + eps)
        scale_ref[...] = scale
        shift_ref[...] = gb_ref[1:2, :] - mean * scale

    @pl.when(phase == 1)
    def _apply():
        o_ref[...] = jnp.maximum(
            y * scale_ref[...] + shift_ref[...], 0.0).astype(o_ref.dtype)


def _im2col(x, k, stride):
    """x: (N, C, H, W) -> (N*Ho*Wo, C*k*k); column order (c, ki, kj) matches
    PyTorch's conv_w.reshape(C_out, C_in*k*k)."""
    n, c, h, w = x.shape
    ho = (h - k) // stride + 1
    wo = (w - k) // stride + 1
    pieces = []
    for i in range(k):
        for j in range(k):
            pieces.append(x[:, :, i:i + stride * ho:stride, j:j + stride * wo:stride])
    p = jnp.stack(pieces, axis=0)               # (k*k, N, C, Ho, Wo)
    p = jnp.transpose(p, (1, 3, 4, 2, 0))       # (N, Ho, Wo, C, k*k)
    return p.reshape(n * ho * wo, c * k * k), ho, wo


@functools.partial(
    jax.jit,
    static_argnames=("kernel_size", "stride", "use_bf16_mxu",
                     "packed_row_tile", "nchw_output"))
def conv_layer_forward(x, conv_w, conv_b, bn_gamma, bn_beta, *,
                       kernel_size=3, stride=2, use_bf16_mxu=True,
                       packed_row_tile=DEFAULT_PACKED_ROW_TILE,
                       nchw_output=False):
    """ConvLayer.forward(x) = relu(batchnorm_train(conv(x))).

    conv_b is accepted for nn.Conv2d API parity but is exactly cancelled by
    the BN mean subtraction (identical to PyTorch), so it is dropped.
    Output layout: (N, Ho, Wo, C) by default (no transpose pass; TPU-preferred
    for the next conv); set nchw_output=True for exact PyTorch NCHW layout.
    """
    del conv_b
    n, c_in, h, w = x.shape
    c_out = conv_w.shape[0]
    k = kernel_size

    patches, ho, wo = _im2col(x, k, stride)              # (M, K) f32, K = c_in*k*k
    m_rows, k_cols = patches.shape

    # ---- channel packing factor & lane-dense output width ------------------
    if c_out <= LANE and LANE % c_out == 0:
        pack = LANE // c_out                             # e.g. 128 // 32 = 4
    else:
        pack = 1
    c_block = _round_up(pack * c_out, LANE)

    # ---- packed-row tiling (8-sublane aligned, K left un-padded in HBM) ----
    mp_rows = (m_rows + pack - 1) // pack                # packed (lane-dense) rows
    tile = _round_up(min(packed_row_tile, _round_up(mp_rows, 8)), 8)
    mp_pad = _round_up(mp_rows, tile)
    num_tiles = mp_pad // tile
    m_pad = mp_pad * pack

    mxu_dtype = jnp.bfloat16 if use_bf16_mxu else jnp.float32
    patches_p = jnp.pad(patches, ((0, m_pad - m_rows), (0, 0))).astype(mxu_dtype)
    patches_packed = patches_p.reshape(mp_pad, pack * k_cols)

    # Block-diagonal weight: W_bd[g*K+f, g*C+c] = W[f, c]  (kron(I_pack, W)).
    w_mat = conv_w.reshape(c_out, c_in * k * k).T                    # (K, C_out)
    w_bd = jnp.kron(jnp.eye(pack, dtype=jnp.float32), w_mat)        # (pack*K, pack*C)
    w_bd = jnp.pad(w_bd, ((0, 0), (0, c_block - pack * c_out))).astype(mxu_dtype)

    # gamma / beta pre-tiled across the pack groups (tiny wrapper-side op).
    gamma_t = jnp.pad(jnp.tile(bn_gamma, pack), (0, c_block - pack * c_out))
    beta_t = jnp.pad(jnp.tile(bn_beta, pack), (0, c_block - pack * c_out))
    gb = jnp.stack([gamma_t, beta_t], axis=0).astype(jnp.float32)    # (2, c_block)

    kernel = functools.partial(
        _fused_conv_bn_relu_kernel,
        inv_m=float(1.0 / m_rows), pack=pack, c_out=c_out, eps=EPS)

    # Output block index: resident block 0 during phase 0 (never written back
    # until phase 1 writes it), streaming blocks i during phase 1.
    out_packed = pl.pallas_call(
        kernel,
        out_shape=jax.ShapeDtypeStruct((mp_pad, c_block), jnp.float32),
        grid=(2, num_tiles),
        in_specs=[
            pl.BlockSpec((tile, pack * k_cols), lambda p, i: (i, 0)),
            pl.BlockSpec((pack * k_cols, c_block), lambda p, i: (0, 0)),
            pl.BlockSpec((2, c_block), lambda p, i: (0, 0)),
        ],
        out_specs=pl.BlockSpec((tile, c_block), lambda p, i: (i * p, 0)),
        scratch_shapes=[
            pltpu.VMEM((1, c_block), jnp.float32),   # sum
            pltpu.VMEM((1, c_block), jnp.float32),   # sum of squares
            pltpu.VMEM((1, c_block), jnp.float32),   # scale
            pltpu.VMEM((1, c_block), jnp.float32),   # shift
        ],
        compiler_params=pltpu.CompilerParams(
            dimension_semantics=("arbitrary", "arbitrary"),
            vmem_limit_bytes=VMEM_LIMIT_BYTES),
    )(patches_packed, w_bd, gb)

    # Un-pack: pure row-major reshape (contiguous; no data movement), then
    # strip the padded rows.
    if pack > 1:
        out_rows = out_packed.reshape(mp_pad * pack, c_out)
    else:
        out_rows = out_packed[:, :c_out]
    out_nhwc = out_rows[:m_rows].reshape(n, ho, wo, c_out)
    if nchw_output:
        return jnp.transpose(out_nhwc, (0, 3, 1, 2))
    return out_nhwc


# ---------------------------------------------------------------------------
# Pure-JAX reference and deterministic init (for in-script validation).
# ---------------------------------------------------------------------------
def conv_layer_reference(x, conv_w, bn_gamma, bn_beta, stride):
    y = lax.conv_general_dilated(
        x, conv_w, window_strides=(stride, stride), padding="VALID",
        dimension_numbers=("NCHW", "OIHW", "NCHW"))
    mean = jnp.mean(y, axis=(0, 2, 3), keepdims=True)
    var = jnp.mean((y - mean) ** 2, axis=(0, 2, 3), keepdims=True)
    y_hat = (y - mean) * lax.rsqrt(var + EPS)
    out = bn_gamma.reshape(1, -1, 1, 1) * y_hat + bn_beta.reshape(1, -1, 1, 1)
    return jnp.maximum(out, 0.0)


def init_params(key, in_channels=1, out_channels=32, kernel_size=3):
    """Matches ConvLayer.__init__ / init_weights (xavier_normal_ conv weight)."""
    k_w, k_b = jax.random.split(key)
    fan_in = in_channels * kernel_size * kernel_size
    fan_out = out_channels * kernel_size * kernel_size
    std = (2.0 / (fan_in + fan_out)) ** 0.5
    conv_w = std * jax.random.normal(
        k_w, (out_channels, in_channels, kernel_size, kernel_size), jnp.float32)
    bound = 1.0 / (fan_in ** 0.5)
    conv_b = jax.random.uniform(
        k_b, (out_channels,), jnp.float32, minval=-bound, maxval=bound)
    bn_gamma = jnp.ones((out_channels,), jnp.float32)
    bn_beta = jnp.zeros((out_channels,), jnp.float32)
    return conv_w, conv_b, bn_gamma, bn_beta


def _rel_err(a, b):
    return float(jnp.linalg.norm((a - b).ravel())
                 / (jnp.linalg.norm(b.ravel()) + 1e-12))


if __name__ == "__main__":
    key = jax.random.PRNGKey(0)
    k_x, k_p, k_x2 = jax.random.split(key, 3)

    # ConvLayer defaults: in_channels=1, out_channels=32, kernel_size=3, stride=2
    out_channels, kernel_size, stride = 32, 3, 2
    conv_w, conv_b, bn_gamma, bn_beta = init_params(k_p, 1, out_channels, kernel_size)

    # Case 1: defaults (bf16 MXU operands, lane-dense packed output, NHWC).
    # (2, 1, 16, 16) -> (2, 7, 7, 32); M = 98 -> 32 packed rows, single tile.
    x = jax.random.normal(k_x, (2, 1, 16, 16), jnp.float32)
    y = conv_layer_forward(x, conv_w, conv_b, bn_gamma, bn_beta,
                           kernel_size=kernel_size, stride=stride)
    jax.block_until_ready(y)
    assert y.shape == (2, 7, 7, out_channels), y.shape
    assert bool(jnp.all(y >= 0.0))
    y_ref_nhwc = jnp.transpose(
        conv_layer_reference(x, conv_w, bn_gamma, bn_beta, stride), (0, 2, 3, 1))
    assert _rel_err(y, y_ref_nhwc) < 5e-2, "NHWC path mismatch vs reference"

    # Case 2: PyTorch-layout (NCHW) output + forced multi-tile two-phase grid.
    # (4, 1, 34, 34) -> M = 1024 -> 256 packed rows -> 2 tiles of 128.
    x2 = jax.random.normal(k_x2, (4, 1, 34, 34), jnp.float32)
    y2 = conv_layer_forward(x2, conv_w, conv_b, bn_gamma, bn_beta,
                            kernel_size=kernel_size, stride=stride,
                            packed_row_tile=128, nchw_output=True)
    jax.block_until_ready(y2)
    assert y2.shape == (4, out_channels, 16, 16), y2.shape
    assert bool(jnp.all(y2 >= 0.0))
    y2_ref = conv_layer_reference(x2, conv_w, bn_gamma, bn_beta, stride)
    assert _rel_err(y2, y2_ref) < 5e-2, "NCHW path mismatch vs reference"

    print("KERNEL_OK")
</pallas_src>

<mosaic_0001>
module attributes {stable_mosaic.version = 11 : i64} {
  func.func @_fused_conv_bn_relu_kernel(%arg0: i32, %arg1: i32, %arg2: memref<32x36xbf16, #tpu.memory_space<vmem>>, %arg3: memref<36x128xbf16, #tpu.memory_space<vmem>>, %arg4: memref<2x128xf32, #tpu.memory_space<vmem>>, %arg5: memref<32x128xf32, #tpu.memory_space<vmem>>, %arg6: memref<1x128xf32, #tpu.memory_space<vmem>>, %arg7: memref<1x128xf32, #tpu.memory_space<vmem>>, %arg8: memref<1x128xf32, #tpu.memory_space<vmem>>, %arg9: memref<1x128xf32, #tpu.memory_space<vmem>>) attributes {dimension_semantics = [#tpu.dimension_semantics<arbitrary>, #tpu.dimension_semantics<arbitrary>], iteration_bounds = array<i64: 2, 1>, scalar_prefetch = 0 : i64, scratch_operands = 4 : i64, tpu.core_type = #tpu.core_type<tc>, window_params = [{transform_indices = @transform_0, window_bounds = array<i64: 32, 36>}, {pipeline_mode = #tpu.pipeline_mode<synchronous>, transform_indices = @transform_1, window_bounds = array<i64: 36, 128>}, {pipeline_mode = #tpu.pipeline_mode<synchronous>, transform_indices = @transform_2, window_bounds = array<i64: 2, 128>}, {transform_indices = @transform_3, window_bounds = array<i64: 32, 128>}]} {
    %c0_i32 = arith.constant 0 : i32
    %0 = arith.cmpi eq, %arg0, %c0_i32 : i32
    %c0_i32_0 = arith.constant 0 : i32
    %1 = arith.cmpi eq, %arg1, %c0_i32_0 : i32
    %2 = arith.andi %0, %1 : i1
    %3 = arith.extui %2 : i1 to i32
    %c0_i32_1 = arith.constant 0 : i32
    %4 = arith.cmpi ne, %3, %c0_i32_1 : i32
    scf.if %4 {
      %cst_11 = arith.constant 0.000000e+00 : f32
      %19 = vector.broadcast %cst_11 : f32 to vector<1x128xf32>
      %c0_12 = arith.constant 0 : index
      %c0_13 = arith.constant 0 : index
      %20 = vector.load %arg6[%c0_12, %c0_13] : memref<1x128xf32, #tpu.memory_space<vmem>>, vector<1x128xf32>
      tpu.vector_store %arg6[%c0_12, %c0_13], %19 {strides = array<i32>} : memref<1x128xf32, #tpu.memory_space<vmem>>, vector<1x128xf32>,
      %cst_14 = arith.constant 0.000000e+00 : f32
      %21 = vector.broadcast %cst_14 : f32 to vector<1x128xf32>
      %c0_15 = arith.constant 0 : index
      %c0_16 = arith.constant 0 : index
      %22 = vector.load %arg7[%c0_15, %c0_16] : memref<1x128xf32, #tpu.memory_space<vmem>>, vector<1x128xf32>
      tpu.vector_store %arg7[%c0_15, %c0_16], %21 {strides = array<i32>} : memref<1x128xf32, #tpu.memory_space<vmem>>, vector<1x128xf32>,
    } else {
    }
    %c0 = arith.constant 0 : index
    %c0_2 = arith.constant 0 : index
    %5 = vector.load %arg2[%c0, %c0_2] : memref<32x36xbf16, #tpu.memory_space<vmem>>, vector<32x36xbf16>
    %c0_3 = arith.constant 0 : index
    %c0_4 = arith.constant 0 : index
    %6 = vector.load %arg3[%c0_3, %c0_4] : memref<36x128xbf16, #tpu.memory_space<vmem>>, vector<36x128xbf16>
    %cst = arith.constant dense<0.000000e+00> : vector<32x128xf32>
    %7 = tpu.matmul %5, %6, %cst {dimension_numbers = #tpu.dot_dimension_numbers<[1], [0], [0], [1], [0, 0, 1, 1], [], []>} : vector<32x36xbf16>, vector<36x128xbf16>, vector<32x128xf32> -> vector<32x128xf32>
    %c0_i32_5 = arith.constant 0 : i32
    %8 = arith.cmpi eq, %arg0, %c0_i32_5 : i32
    %9 = arith.extui %8 : i1 to i32
    %c0_i32_6 = arith.constant 0 : i32
    %10 = arith.cmpi ne, %9, %c0_i32_6 : i32
    scf.if %10 {
      %c0_11 = arith.constant 0 : index
      %c0_12 = arith.constant 0 : index
      %19 = vector.load %arg6[%c0_11, %c0_12] : memref<1x128xf32, #tpu.memory_space<vmem>>, vector<1x128xf32>
      %cst_13 = arith.constant dense<0.000000e+00> : vector<128xf32>
      %20 = vector.multi_reduction <add>, %7, %cst_13 [0] : vector<32x128xf32> to vector<128xf32>
      %21 = vector.shape_cast %20 : vector<128xf32> to vector<1x128xf32>
      %22 = arith.addf %19, %21 : vector<1x128xf32>
      %c0_14 = arith.constant 0 : index
      %c0_15 = arith.constant 0 : index
      %23 = vector.load %arg6[%c0_14, %c0_15] : memref<1x128xf32, #tpu.memory_space<vmem>>, vector<1x128xf32>
      tpu.vector_store %arg6[%c0_14, %c0_15], %22 {strides = array<i32>} : memref<1x128xf32, #tpu.memory_space<vmem>>, vector<1x128xf32>,
      %c0_16 = arith.constant 0 : index
      %c0_17 = arith.constant 0 : index
      %24 = vector.load %arg7[%c0_16, %c0_17] : memref<1x128xf32, #tpu.memory_space<vmem>>, vector<1x128xf32>
      %25 = arith.mulf %7, %7 : vector<32x128xf32>
      %cst_18 = arith.constant dense<0.000000e+00> : vector<128xf32>
      %26 = vector.multi_reduction <add>, %25, %cst_18 [0] : vector<32x128xf32> to vector<128xf32>
      %27 = vector.shape_cast %26 : vector<128xf32> to vector<1x128xf32>
      %28 = arith.addf %24, %27 : vector<1x128xf32>
      %c0_19 = arith.constant 0 : index
      %c0_20 = arith.constant 0 : index
      %29 = vector.load %arg7[%c0_19, %c0_20] : memref<1x128xf32, #tpu.memory_space<vmem>>, vector<1x128xf32>
      tpu.vector_store %arg7[%c0_19, %c0_20], %28 {strides = array<i32>} : memref<1x128xf32, #tpu.memory_space<vmem>>, vector<1x128xf32>,
    } else {
    }
    %c1_i32 = arith.constant 1 : i32
    %11 = arith.cmpi eq, %arg0, %c1_i32 : i32
    %c0_i32_7 = arith.constant 0 : i32
    %12 = arith.cmpi eq, %arg1, %c0_i32_7 : i32
    %13 = arith.andi %11, %12 : i1
    %14 = arith.extui %13 : i1 to i32
    %c0_i32_8 = arith.constant 0 : i32
    %15 = arith.cmpi ne, %14, %c0_i32_8 : i32
    scf.if %15 {
      %c0_11 = arith.constant 0 : index
      %c0_12 = arith.constant 0 : index
      %19 = vector.load %arg6[%c0_11, %c0_12] : memref<1x128xf32, #tpu.memory_space<vmem>>, vector<1x128xf32>
      %c0_13 = arith.constant 0 : index
      %c0_14 = arith.constant 0 : index
      %20 = vector.load %arg7[%c0_13, %c0_14] : memref<1x128xf32, #tpu.memory_space<vmem>>, vector<1x128xf32>
      %c32_i32 = arith.constant 32 : i32
      %21 = tpu.dynamic_rotate %19 by %c32_i32 dim 1 : vector<1x128xf32>, i32 -> vector<1x128xf32>
      %22 = arith.addf %19, %21 : vector<1x128xf32>
      %c32_i32_15 = arith.constant 32 : i32
      %23 = tpu.dynamic_rotate %20 by %c32_i32_15 dim 1 : vector<1x128xf32>, i32 -> vector<1x128xf32>
      %24 = arith.addf %20, %23 : vector<1x128xf32>
      %c64_i32 = arith.constant 64 : i32
      %25 = tpu.dynamic_rotate %19 by %c64_i32 dim 1 : vector<1x128xf32>, i32 -> vector<1x128xf32>
      %26 = arith.addf %22, %25 : vector<1x128xf32>
      %c64_i32_16 = arith.constant 64 : i32
      %27 = tpu.dynamic_rotate %20 by %c64_i32_16 dim 1 : vector<1x128xf32>, i32 -> vector<1x128xf32>
      %28 = arith.addf %24, %27 : vector<1x128xf32>
      %c96_i32 = arith.constant 96 : i32
      %29 = tpu.dynamic_rotate %19 by %c96_i32 dim 1 : vector<1x128xf32>, i32 -> vector<1x128xf32>
      %30 = arith.addf %26, %29 : vector<1x128xf32>
      %c96_i32_17 = arith.constant 96 : i32
      %31 = tpu.dynamic_rotate %20 by %c96_i32_17 dim 1 : vector<1x128xf32>, i32 -> vector<1x128xf32>
      %32 = arith.addf %28, %31 : vector<1x128xf32>
      %cst_18 = arith.constant 0.0102040814 : f32
      %33 = vector.broadcast %cst_18 : f32 to vector<1x128xf32>
      %34 = arith.mulf %30, %33 : vector<1x128xf32>
      %cst_19 = arith.constant 0.0102040814 : f32
      %35 = vector.broadcast %cst_19 : f32 to vector<1x128xf32>
      %36 = arith.mulf %32, %35 : vector<1x128xf32>
      %37 = arith.mulf %34, %34 : vector<1x128xf32>
      %38 = arith.subf %36, %37 : vector<1x128xf32>
      %cst_20 = arith.constant 0.000000e+00 : f32
      %39 = vector.broadcast %cst_20 : f32 to vector<1x128xf32>
      %40 = arith.maximumf %38, %39 : vector<1x128xf32>
      %c0_21 = arith.constant 0 : index
      %c0_22 = arith.constant 0 : index
      %41 = vector.load %arg4[%c0_21, %c0_22] : memref<2x128xf32, #tpu.memory_space<vmem>>, vector<1x128xf32>
      %cst_23 = arith.constant 9.99999974E-6 : f32
      %42 = vector.broadcast %cst_23 : f32 to vector<1x128xf32>
      %43 = arith.addf %40, %42 : vector<1x128xf32>
      %44 = math.rsqrt %43 : vector<1x128xf32>
      %45 = arith.mulf %41, %44 : vector<1x128xf32>
      %c0_24 = arith.constant 0 : index
      %c0_25 = arith.constant 0 : index
      %46 = vector.load %arg8[%c0_24, %c0_25] : memref<1x128xf32, #tpu.memory_space<vmem>>, vector<1x128xf32>
      tpu.vector_store %arg8[%c0_24, %c0_25], %45 {strides = array<i32>} : memref<1x128xf32, #tpu.memory_space<vmem>>, vector<1x128xf32>,
      %c1 = arith.constant 1 : index
      %c0_26 = arith.constant 0 : index
      %47 = vector.load %arg4[%c1, %c0_26] : memref<2x128xf32, #tpu.memory_space<vmem>>, vector<1x128xf32>
      %48 = arith.mulf %34, %45 : vector<1x128xf32>
      %49 = arith.subf %47, %48 : vector<1x128xf32>
      %c0_27 = arith.constant 0 : index
      %c0_28 = arith.constant 0 : index
      %50 = vector.load %arg9[%c0_27, %c0_28] : memref<1x128xf32, #tpu.memory_space<vmem>>, vector<1x128xf32>
      tpu.vector_store %arg9[%c0_27, %c0_28], %49 {strides = array<i32>} : memref<1x128xf32, #tpu.memory_space<vmem>>, vector<1x128xf32>,
    } else {
    }
    %c1_i32_9 = arith.constant 1 : i32
    %16 = arith.cmpi eq, %arg0, %c1_i32_9 : i32
    %17 = arith.extui %16 : i1 to i32
    %c0_i32_10 = arith.constant 0 : i32
    %18 = arith.cmpi ne, %17, %c0_i32_10 : i32
    scf.if %18 {
      %c0_11 = arith.constant 0 : index
      %c0_12 = arith.constant 0 : index
      %19 = vector.load %arg8[%c0_11, %c0_12] : memref<1x128xf32, #tpu.memory_space<vmem>>, vector<1x128xf32>
      %20 = vector.broadcast %19 : vector<1x128xf32> to vector<32x128xf32>
      %21 = arith.mulf %7, %20 : vector<32x128xf32>
      %c0_13 = arith.constant 0 : index
      %c0_14 = arith.constant 0 : index
      %22 = vector.load %arg9[%c0_13, %c0_14] : memref<1x128xf32, #tpu.memory_space<vmem>>, vector<1x128xf32>
      %23 = vector.broadcast %22 : vector<1x128xf32> to vector<32x128xf32>
      %24 = arith.addf %21, %23 : vector<32x128xf32>
      %cst_15 = arith.constant 0.000000e+00 : f32
      %25 = vector.broadcast %cst_15 : f32 to vector<32x128xf32>
      %26 = arith.maximumf %24, %25 : vector<32x128xf32>
      %c0_16 = arith.constant 0 : index
      %c0_17 = arith.constant 0 : index
      %27 = vector.load %arg5[%c0_16, %c0_17] : memref<32x128xf32, #tpu.memory_space<vmem>>, vector<32x128xf32>
      tpu.vector_store %arg5[%c0_16, %c0_17], %26 {strides = array<i32>} : memref<32x128xf32, #tpu.memory_space<vmem>>, vector<32x128xf32>,
    } else {
    }
    return
  }
  func.func @transform_0(%arg0: i32, %arg1: i32) -> (i32, i32) {
    %c0_i32 = arith.constant 0 : i32
    %c0_i32_0 = arith.constant 0 : i32
    return %arg1, %c0_i32 : i32, i32
  }
  func.func @transform_1(%arg0: i32, %arg1: i32) -> (i32, i32) {
    %c0_i32 = arith.constant 0 : i32
    %c0_i32_0 = arith.constant 0 : i32
    %c0_i32_1 = arith.constant 0 : i32
    return %c0_i32, %c0_i32_0 : i32, i32
  }
  func.func @transform_2(%arg0: i32, %arg1: i32) -> (i32, i32) {
    %c0_i32 = arith.constant 0 : i32
    %c0_i32_0 = arith.constant 0 : i32
    %c0_i32_1 = arith.constant 0 : i32
    return %c0_i32, %c0_i32_0 : i32, i32
  }
  func.func @transform_3(%arg0: i32, %arg1: i32) -> (i32, i32) {
    %0 = arith.muli %arg1, %arg0 : i32
    %c0_i32 = arith.constant 0 : i32
    %c0_i32_0 = arith.constant 0 : i32
    return %0, %c0_i32 : i32, i32
  }
}

</mosaic_0001>

<llo_original>
// kernel: tile.13
$region0: #{tile.13}
  #allocation0 [shape = 's32[1]{0}', space=sflag, size = 0x4, scoped, tag = 'scoped memory for tile.13']
  %s0 = inlined_call_operand.vmem [shape: f32[32], index: 0, kind: input, shape index: {}]
  %s1 = inlined_call_operand.vmem [shape: f32[4,32], index: 1, kind: output, shape index: {}]
  // Predicated region
  $region2: #{tile.13} parent=0 // pred_check
    _
  $region3: #{tile.13} parent=0 // pred_check_branch
    %3 = sbr.rel (0) target = $region5
  $region4: #{tile.13} parent=0 // pred_region
    _
  $region5: #{tile.13} parent=0 // pred_fallthru
    _
  %v4 = vld [vmem:[%s0] ss:$0 sm:$0xff]
  %5 = vst [vmem:[%s1] sm:$0xf] %v4

// kernel: conv_layer_forward.1
$region0: #{conv_layer_forward.1}
  #allocation0 [shape = 'u32[]', space=smem, size = 0x4, offset = 0x4, fixed_abs, tag = 'smem constant byte address 0x4 - core index']
  #allocation1 [shape = 'u32[144,128]{1,0:T(1,128)}', space=vmem, size = 0x12000, scoped, tag = 'internal scratch']
  #allocation2 [shape = 'f32[1,128]{1,0:T(1,128)}', space=vmem, size = 0x200, scoped, tag = 'scratch operand']
  #allocation3 [shape = 'f32[1,128]{1,0:T(1,128)}', space=vmem, size = 0x200, scoped, tag = 'scratch operand']
  #allocation4 [shape = 'f32[1,128]{1,0:T(1,128)}', space=vmem, size = 0x200, scoped, tag = 'scratch operand']
  #allocation5 [shape = 'f32[1,128]{1,0:T(1,128)}', space=vmem, size = 0x200, scoped, tag = 'scratch operand']
  %s0 = inlined_call_operand.vmem [shape: bf16[32,36], index: 0, kind: input, shape index: {}]
  %s1 = inlined_call_operand.vmem [shape: bf16[36,128], index: 1, kind: input, shape index: {}]
  %s2 = inlined_call_operand.vmem [shape: f32[2,128], index: 2, kind: input, shape index: {}]
  %s3 = inlined_call_operand.vmem [shape: f32[32,128], index: 3, kind: output, shape index: {}]
  %s4 = sld [smem:[#allocation0]]
  $region61: #{conv_layer_forward.1} parent=0
    _
  %s6 = ssub.s32 1, %s4
  %s7 = scalar_select 0, %s6, %s4
  loop: start=0, step=1, limit=4
  $region2: #{conv_layer_forward.1} parent=0 // loop_pre_header
    _
  $region3: #{conv_layer_forward.1} parent=0 // loop_header
    %s9 = sphi 0, %s13
    %p10 = scmp.ge.s32.totalorder %s9, 4
    %s16 = sphi 0, %s28
    %s17 = sphi 0, %s24
    %s18 = sphi 0, %s16
    %s19 = sphi 0, %s17
    %s20 = sphi 0, %s18
    %s21 = sphi 0, %s19
    %s31 = sphi 0, %s33
    %s34 = sphi 0, %s31
    %s35 = sphi 0, %s34
    %s51 = sphi 0, %s35
    %s55 = sphi 0, %s55
    %s57 = sphi 0, %s55
    %s58 = sphi 0, %s57
    %s72 = sphi 0, %s58
    %s76 = sphi 0, %s76
    %s78 = sphi 0, %s76
    %s79 = sphi 0, %s78
    %s93 = sphi 0, %s79
    %s101 = sphi 0, %s103
    %s104 = sphi 0, %s101
    %s105 = sphi 0, %s104
    %s121 = sphi 0, %s105
  $region4: #{conv_layer_forward.1} parent=0 // loop_header_branch
    %12 = sbr.rel (%p10) target = $region8
  $region5: #{conv_layer_forward.1} parent=0 // loop_body
    %s14 = ssub.s32 %s9, 1
    %s15 = ssub.s32 %s9, 2
    %s22 = sadd.s32 1, %s17
    %p23 = scmp.ge.s32.totalorder %s22, 1
    %s24 = scalar_select %p23, 0, %s22
    %s25 = sadd.s32 1, %s16
    %s26 = scalar_select %p23, %s25, %s16
    %p27 = scmp.ge.s32.totalorder %s26, 2
    %s28 = scalar_select %p27, 0, %s26
    %s29 = ssub.s32 %s17, %s24
    %p30 = scmp.eq.s32.totalorder %s29, 0
    %s32 = sadd.s32 %s31, 1
    %s33 = scalar_select %p30, %s31, %s32
    %p36 = pneg %p30
    %p37 = scmp.eq.s32.totalorder %s9, 1
    %p38 = por %p36, %p37
    %p39 = scmp.ne.s32.totalorder %s31, %s34
    %p40 = scmp.eq.s32.totalorder %s9, 0
    %p41 = por %p39, %p40
    %p42 = scmp.ne.s32.totalorder %s31, %s34
    %p43 = scmp.eq.s32.totalorder %s14, 1
    %p44 = por %p42, %p43
    %p45 = scmp.ne.s32.totalorder %s34, %s35
    %p46 = scmp.eq.s32.totalorder %s14, 0
    %p47 = por %p45, %p46
    %p48 = scmp.ne.s32.totalorder %s34, %s35
    %p49 = scmp.eq.s32.totalorder %s15, 1
    %p50 = por %p48, %p49
    %p52 = scmp.ne.s32.totalorder %s35, %s51
    %p53 = scmp.eq.s32.totalorder %s15, 0
    %p54 = por %p52, %p53
    %s56 = sadd.s32 %s55, 1
    %p59 = scmp.eq.s32.totalorder %s9, 1
    %p60 = scmp.ne.s32.totalorder %s55, %s57
    %p61 = scmp.eq.s32.totalorder %s9, 0
    %p62 = por %p60, %p61
    %p63 = scmp.ne.s32.totalorder %s55, %s57
    %p64 = scmp.eq.s32.totalorder %s14, 1
    %p65 = por %p63, %p64
    %p66 = scmp.ne.s32.totalorder %s57, %s58
    %p67 = scmp.eq.s32.totalorder %s14, 0
    %p68 = por %p66, %p67
    %p69 = scmp.ne.s32.totalorder %s57, %s58
    %p70 = scmp.eq.s32.totalorder %s15, 1
    %p71 = por %p69, %p70
    %p73 = scmp.ne.s32.totalorder %s58, %s72
    %p74 = scmp.eq.s32.totalorder %s15, 0
    %p75 = por %p73, %p74
    %s77 = sadd.s32 %s76, 1
    %p80 = scmp.eq.s32.totalorder %s9, 1
    %p81 = scmp.ne.s32.totalorder %s76, %s78
    %p82 = scmp.eq.s32.totalorder %s9, 0
    %p83 = por %p81, %p82
    %p84 = scmp.ne.s32.totalorder %s76, %s78
    %p85 = scmp.eq.s32.totalorder %s14, 1
    %p86 = por %p84, %p85
    %p87 = scmp.ne.s32.totalorder %s78, %s79
    %p88 = scmp.eq.s32.totalorder %s14, 0
    %p89 = por %p87, %p88
    %p90 = scmp.ne.s32.totalorder %s78, %s79
    %p91 = scmp.eq.s32.totalorder %s15, 1
    %p92 = por %p90, %p91
    %p94 = scmp.ne.s32.totalorder %s79, %s93
    %p95 = scmp.eq.s32.totalorder %s15, 0
    %p96 = por %p94, %p95
    %s97 = smul.u32 %s17, %s16
    %s98 = smul.u32 %s24, %s28
    %s99 = ssub.s32 %s97, %s98
    %p100 = scmp.eq.s32.totalorder %s99, 0
    %s102 = sadd.s32 %s101, 1
    %s103 = scalar_select %p100, %s101, %s102
    %p106 = pneg %p100
    %p107 = scmp.eq.s32.totalorder %s9, 1
    %p108 = por %p106, %p107
    %p109 = scmp.ne.s32.totalorder %s101, %s104
    %p110 = scmp.eq.s32.totalorder %s9, 0
    %p111 = por %p109, %p110
    %p112 = scmp.ne.s32.totalorder %s101, %s104
    %p113 = scmp.eq.s32.totalorder %s14, 1
    %p114 = por %p112, %p113
    %p115 = scmp.ne.s32.totalorder %s104, %s105
    %p116 = scmp.eq.s32.totalorder %s14, 0
    %p117 = por %p115, %p116
    %p118 = scmp.ne.s32.totalorder %s104, %s105
    %p119 = scmp.eq.s32.totalorder %s15, 1
    %p120 = por %p118, %p119
    %p122 = scmp.ne.s32.totalorder %s105, %s121
    %p123 = scmp.eq.s32.totalorder %s15, 0
    %p124 = por %p122, %p123
    %p125 = scmp.le.s32.totalorder 1, %s9
    %p126 = scmp.lt.s32.totalorder %s9, 3
    %p127 = pnand %p125, %p126
    %p128 = pneg %p127
    // Predicated region
    $region9: #{conv_layer_forward.1} parent=5 // pred_check
      _
    $region10: #{conv_layer_forward.1} parent=5 // pred_check_branch
      %130 = sbr.rel (%p127) target = $region12
    $region11: #{conv_layer_forward.1} parent=5 // pred_region
      %s131 = ssub.s32 %s9, 1
      // Predicated region
      $region13: #{conv_layer_forward.1} parent=11 // pred_check
        %p132 = pneg %p47
      $region14: #{conv_layer_forward.1} parent=11 // pred_check_branch
        %134 = sbr.rel (%p132) target = $region16
      $region15: #{conv_layer_forward.1} parent=11 // pred_region
        %s135 = smul.u32 4, %s19
        %p136 = scmp.lt.s32.totalorder %s135, 3
        %s137 = scalar_select %p136, %s135, 3
        %s138 = smul.addr %s137, 4
        %s139 = scalar_lea.vmem %s0, %s138
        %s140 = smul.u32 4, %s19
      $region16: #{conv_layer_forward.1} parent=11 // pred_fallthru
        _
      // Predicated region
      $region17: #{conv_layer_forward.1} parent=11 // pred_check
        %p141 = pneg %p68
      $region18: #{conv_layer_forward.1} parent=11 // pred_check_branch
        %143 = sbr.rel (%p141) target = $region20
      $region19: #{conv_layer_forward.1} parent=11 // pred_region
        _
      $region20: #{conv_layer_forward.1} parent=11 // pred_fallthru
        _
      // Predicated region
      $region21: #{conv_layer_forward.1} parent=11 // pred_check
        %p144 = pneg %p89
      $region22: #{conv_layer_forward.1} parent=11 // pred_check_branch
        %146 = sbr.rel (%p144) target = $region24
      $region23: #{conv_layer_forward.1} parent=11 // pred_region
        _
      $region24: #{conv_layer_forward.1} parent=11 // pred_fallthru
        _
    $region12: #{conv_layer_forward.1} parent=5 // pred_fallthru
      _
    %p147 = scmp.lt.s32.totalorder %s9, 2
    // Predicated region
    $region25: #{conv_layer_forward.1} parent=5 // pred_check
      %p148 = pneg %p147
    $region26: #{conv_layer_forward.1} parent=5 // pred_check_branch
      %150 = sbr.rel (%p148) target = $region28
    $region27: #{conv_layer_forward.1} parent=5 // pred_region
      _
    $region28: #{conv_layer_forward.1} parent=5 // pred_fallthru
      _
    %p151 = scmp.le.s32.totalorder 1, %s9
    %p152 = scmp.lt.s32.totalorder %s9, 3
    %p153 = pnand %p151, %p152
    %p154 = pneg %p153
    // Predicated region
    $region29: #{conv_layer_forward.1} parent=5 // pred_check
      _
    $region30: #{conv_layer_forward.1} parent=5 // pred_check_branch
      %156 = sbr.rel (%p153) target = $region32
    $region31: #{conv_layer_forward.1} parent=5 // pred_region
      %s157 = ssub.s32 %s9, 1
      %s158 = smul.u32 4, %s19
      %p159 = scmp.lt.s32.totalorder %s158, 3
      %s160 = scalar_select %p159, %s158, 3
      %s161 = smul.addr %s160, 4
      %s162 = scalar_lea.vmem %s0, %s161
      %p163 = pneg %p47
      %p164 = pneg %p44
      %p165 = pneg %p68
      %p166 = pneg %p65
      %p167 = pneg %p89
      %p168 = pneg %p86
      %p169 = pneg %p117
      %p170 = pneg %p114
      %s171 = smul.u32 %s19, %s18
      %s172 = smul.u32 4, %s171
      %p173 = scmp.lt.s32.totalorder %s172, 3
      %s174 = scalar_select %p173, %s172, 3
      %s175 = smul.addr %s174, 8
      %s176 = scalar_lea.vmem %s3, %s175
      %s177 = smul.u32 4, %s19
      %p178 = scmp.lt.s32.totalorder %s177, 3
      %s179 = scalar_select %p178, %s177, 3
      %s180 = smul.addr %s179, 4
      %s181 = scalar_lea.vmem %s0, %s180
      %s182 = smul.u32 4, %s19
      %s183 = smul.u32 %s19, %s18
      %s184 = smul.u32 4, %s183
      %p185 = scmp.lt.s32.totalorder %s184, 3
      %s186 = scalar_select %p185, %s184, 3
      %s187 = smul.addr %s186, 8
      %s188 = scalar_lea.vmem %s3, %s187
      %s189 = smul.u32 %s19, %s18
      %s190 = smul.u32 4, %s189
      %p192 = scmp.eq.s32.totalorder %s18, 0
      %p193 = scmp.eq.s32.totalorder %s19, 0
      %p194 = pnand %p192, %p193
      %p195 = pneg %p194
      // Predicated region
      $region33: #{conv_layer_forward.1} parent=31 // pred_check
        _
      $region34: #{conv_layer_forward.1} parent=31 // pred_check_branch
        %197 = sbr.rel (%p194) target = $region36
      $region35: #{conv_layer_forward.1} parent=31 // pred_region
        %198 = vst [vmem:[#allocation2] sm:$0x1] 0.0
        %199 = vst [vmem:[#allocation3] sm:$0x1] 0.0
      $region36: #{conv_layer_forward.1} parent=31 // pred_fallthru
        _
      %v200 = vld [vmem:[%s181] sm:$0xf]
      %v201 = vld [vmem:[%s181 + $0x4] sm:$0xf]
      %v202 = vld [vmem:[%s181 + $0x8] sm:$0xf]
      %v203 = vld [vmem:[%s181 + $0xc] sm:$0xf]
      %v204 = vld [vmem:[%s1] sm:$0xf]
      %v205 = vld [vmem:[%s1 + $0x4] sm:$0xf]
      %v206 = vld [vmem:[%s1 + $0x8] sm:$0xf]
      %v207 = vld [vmem:[%s1 + $0xc] sm:$0xf]
      %v208 = vld [vmem:[%s1 + $0x10] sm:$0x3]
      %v213 = vunpack.c.l.b16 %v200
      %v214 = vunpack.c.l.b16 %v201
      %v215 = vunpack.c.l.b16 %v202
      %v216 = vunpack.c.l.b16 %v203
      %v217 = vpack.c.b16 %v214, %v213
      %v218 = vpack.c.b16 %v216, %v215
      %v224 = vunpack.c.l.b16 %v204
      %v225 = vunpack.c.l.b16 %v205
      %v226 = vunpack.c.l.b16 %v206
      %v227 = vunpack.c.l.b16 %v207
      %v228 = vunpack.c.l.b16 %v208
      %v229 = vpack.c.b16 %v225, %v224
      %v230 = vpack.c.b16 %v227, %v226
      %v231 = vpack.c.b16 %v228, %v228
      %vm234 = vcmask 293888
      %v236 = vsel %vm234, %v217, 0
      %v239 = vsel %vm234, %v218, 0
      %vm241 = vcmask 1041408
      %v243 = vsel %vm241, %v231, 0
      %245 = vmatprep.subr.bf16.mxu0 0
      %246 = vmatpush1.bf16.msra.mxu0 %v229
      %247 = vmatprep.subr.bf16.mxu0 0
      %248 = vmatpush1.bf16.msra.mxu0 %v230
      %249 = vmatprep.subr.bf16.mxu0 0
      %250 = vmatpush1.bf16.msra.mxu0 %v243
      %251 = vmatprep.subr.bf16.mxu0 0
      %252 = vmatpush1.bf16.msra.mxu0 0
      %253 = vmatprep.subr.bf16.mxu0 0
      %254 = vmatpush1.bf16.msra.mxu0 0
      %255 = vmatprep.subr.bf16.mxu0 0
      %256 = vmatpush1.bf16.msra.mxu0 0
      %257 = vmatprep.subr.bf16.mxu0 0
      %258 = vmatpush1.bf16.msra.mxu0 0
      %259 = vmatprep.subr.bf16.mxu0 0
      %260 = vmatpush1.bf16.msra.mxu0 0
      %261 = vmatprep.subr.bf16.mxu0 0
      %262 = vmatpush1.bf16.msra.mxu0 0
      %263 = vmatprep.subr.bf16.mxu0 0
      %264 = vmatpush1.bf16.msra.mxu0 0
      %265 = vmatprep.subr.bf16.mxu0 0
      %266 = vmatpush1.bf16.msra.mxu0 0
      %267 = vmatprep.subr.bf16.mxu0 0
      %268 = vmatpush1.bf16.msra.mxu0 0
      %269 = vmatprep.subr.bf16.mxu0 0
      %270 = vmatpush1.bf16.msra.mxu0 0
      %271 = vmatprep.subr.bf16.mxu0 0
      %272 = vmatpush1.bf16.msra.mxu0 0
      %273 = vmatprep.subr.bf16.mxu0 0
      %274 = vmatpush1.bf16.msra.mxu0 0
      %275 = vmatprep.subr.bf16.mxu0 0
      %276 = vmatpush1.bf16.msra.mxu0 0
      %277 = vmatprep.mubr.bf16.mxu0 0
      %278 = vmatmul.mubr.bf16.gmra.mrb[0].mxu0 %v236
      %v279 = vpop.f32.mrb[0].mxu0
      %v280 = vadd.f32 0.0, %v279
      %v281 = vpop.f32.mrb[0].mxu0
      %v282 = vpop.f32.mrb[0].mxu0
      %v283 = vadd.f32 0.0, %v282
      %v284 = vpop.f32.mrb[0].mxu0
      %285 = vmatprep.mubr.bf16.mxu0 0
      %286 = vmatmul.mubr.bf16.gmra.mrb[0].mxu0 %v239
      %v287 = vpop.f32.mrb[0].mxu0
      %v288 = vadd.f32 0.0, %v287
      %v289 = vpop.f32.mrb[0].mxu0
      %v290 = vpop.f32.mrb[0].mxu0
      %v291 = vadd.f32 0.0, %v290
      %v292 = vpop.f32.mrb[0].mxu0
      %293 = vdwg.mxu0
      // Predicated region
      $region37: #{conv_layer_forward.1} parent=31 // pred_check
        %p294 = pneg %p192
      $region38: #{conv_layer_forward.1} parent=31 // pred_check_branch
        %296 = sbr.rel (%p294) target = $region40
      $region39: #{conv_layer_forward.1} parent=31 // pred_region
        %v297 = vld [vmem:[#allocation2] sm:$0x1]
        %v298 = vadd.f32 %v280, %v283
        %v299 = vadd.f32 %v298, %v288
        %v300 = vadd.f32 %v299, %v291
        %v301 = vrot.slane %v300, 4
        %v302 = vadd.f32 %v300, %v301
        %v303 = vrot.slane %v302, 2
        %v304 = vadd.f32 %v302, %v303
        %v305 = vrot.slane %v304, 1
        %v306 = vadd.f32 %v304, %v305
        %v307 = vadd.f32 %v297, %v306
        %308 = vst [vmem:[#allocation2] sm:$0x1] %v307
        %v309 = vld [vmem:[#allocation3] sm:$0x1]
        %v310 = vmul.f32 %v280, %v280
        %v311 = vmul.f32 %v283, %v283
        %v312 = vmul.f32 %v288, %v288
        %v313 = vmul.f32 %v291, %v291
        %v314 = vadd.f32 %v310, %v311
        %v315 = vadd.f32 %v314, %v312
        %v316 = vadd.f32 %v315, %v313
        %v317 = vrot.slane %v316, 4
        %v318 = vadd.f32 %v316, %v317
        %v319 = vrot.slane %v318, 2
        %v320 = vadd.f32 %v318, %v319
        %v321 = vrot.slane %v320, 1
        %v322 = vadd.f32 %v320, %v321
        %v323 = vadd.f32 %v309, %v322
        %324 = vst [vmem:[#allocation3] sm:$0x1] %v323
      $region40: #{conv_layer_forward.1} parent=31 // pred_fallthru
        _
      %p325 = scmp.eq.s32.totalorder %s18, 1
      %p326 = pnand %p325, %p193
      %p327 = pneg %p326
      // Predicated region
      $region41: #{conv_layer_forward.1} parent=31 // pred_check
        _
      $region42: #{conv_layer_forward.1} parent=31 // pred_check_branch
        %329 = sbr.rel (%p326) target = $region44
      $region43: #{conv_layer_forward.1} parent=31 // pred_region
        %v330 = vld [vmem:[#allocation2] sm:$0x1]
        %v331 = vld [vmem:[#allocation3] sm:$0x1]
        %332 = vrot.lane.b32.xlu0 %v330, 32
        %v333 = vpop.permute.xlu0 %332
        %v334 = vadd.f32 %v330, %v333
        %335 = vrot.lane.b32.xlu0 %v331, 32
        %v336 = vpop.permute.xlu0 %335
        %v337 = vadd.f32 %v331, %v336
        %338 = vrot.lane.b32.xlu0 %v330, 64
        %v339 = vpop.permute.xlu0 %338
        %v340 = vadd.f32 %v334, %v339
        %341 = vrot.lane.b32.xlu0 %v331, 64
        %v342 = vpop.permute.xlu0 %341
        %v343 = vadd.f32 %v337, %v342
        %344 = vrot.lane.b32.xlu0 %v330, 96
        %v345 = vpop.permute.xlu0 %344
        %v346 = vadd.f32 %v340, %v345
        %347 = vrot.lane.b32.xlu0 %v331, 96
        %v348 = vpop.permute.xlu0 %347
        %v349 = vadd.f32 %v343, %v348
        %v350 = vmul.f32 %v346, 0.010204081
        %v351 = vmul.f32 %v349, 0.010204081
        %v352 = vmul.f32 %v350, %v350
        %v353 = vsub.f32 %v351, %v352
        %v354 = vmax.f32 %v353, 0.0
        %v355 = vld [vmem:[%s2] sm:$0x1]
        %v356 = vadd.f32 %v354, 1e-05
        %v357 = vrsqrt.pop %v356
        %v358 = vmul.f32 %v355, %v357
        %359 = vst [vmem:[#allocation4] sm:$0x1] %v358
        %v360 = vld [vmem:[%s2 + $0x1] sm:$0x1]
        %v361 = vmul.f32 %v350, %v358
        %v362 = vsub.f32 %v360, %v361
        %363 = vst [vmem:[#allocation5] sm:$0x1] %v362
      $region44: #{conv_layer_forward.1} parent=31 // pred_fallthru
        _
      // Predicated region
      $region45: #{conv_layer_forward.1} parent=31 // pred_check
        %p364 = pneg %p325
      $region46: #{conv_layer_forward.1} parent=31 // pred_check_branch
        %366 = sbr.rel (%p364) target = $region48
      $region47: #{conv_layer_forward.1} parent=31 // pred_region
        %v367 = vld [vmem:[#allocation4] sm:$0x1]
        %v369 = vlaneseq
        %v370 = vshrl.u32 %v369, 7
        %v371 = vsub.s32 0, %v370
        %v372 = vrot.slane %v367, %v371
        %v374 = vmul.f32 %v280, %v372
        %v375 = vmul.f32 %v283, %v372
        %v376 = vmul.f32 %v288, %v372
        %v377 = vmul.f32 %v291, %v372
        %v378 = vld [vmem:[#allocation5] sm:$0x1]
        %v380 = vlaneseq
        %v381 = vshrl.u32 %v380, 7
        %v382 = vsub.s32 0, %v381
        %v383 = vrot.slane %v378, %v382
        %v385 = vadd.f32 %v374, %v383
        %v386 = vadd.f32 %v375, %v383
        %v387 = vadd.f32 %v376, %v383
        %v388 = vadd.f32 %v377, %v383
        %v389 = vmax.f32 %v385, 0.0
        %v390 = vmax.f32 %v386, 0.0
        %v391 = vmax.f32 %v387, 0.0
        %v392 = vmax.f32 %v388, 0.0
        %393 = vst [vmem:[%s188] sm:$0xff] %v389
        %394 = vst [vmem:[%s188 + $0x8] sm:$0xff] %v390
        %395 = vst [vmem:[%s188 + $0x10] sm:$0xff] %v391
        %396 = vst [vmem:[%s188 + $0x18] sm:$0xff] %v392
      $region48: #{conv_layer_forward.1} parent=31 // pred_fallthru
        _
      %s397 = smul.u32 %s19, %s18
      %s398 = smul.u32 4, %s397
      %p399 = scmp.lt.s32.totalorder %s398, 3
      %s400 = scalar_select %p399, %s398, 3
      %s401 = smul.addr %s400, 8
      %s402 = scalar_lea.vmem %s3, %s401
      // Predicated region
      $region49: #{conv_layer_forward.1} parent=31 // pred_check
        %p403 = pneg %p114
      $region50: #{conv_layer_forward.1} parent=31 // pred_check_branch
        %405 = sbr.rel (%p403) target = $region52
      $region51: #{conv_layer_forward.1} parent=31 // pred_region
        %s406 = smul.u32 %s19, %s18
        %s407 = smul.u32 4, %s406
      $region52: #{conv_layer_forward.1} parent=31 // pred_fallthru
        _
    $region32: #{conv_layer_forward.1} parent=5 // pred_fallthru
      _
    %p408 = scmp.le.s32.totalorder 2, %s9
    // Predicated region
    $region53: #{conv_layer_forward.1} parent=5 // pred_check
      %p409 = pneg %p408
    $region54: #{conv_layer_forward.1} parent=5 // pred_check_branch
      %411 = sbr.rel (%p409) target = $region56
    $region55: #{conv_layer_forward.1} parent=5 // pred_region
      %s412 = ssub.s32 %s9, 2
      // Predicated region
      $region57: #{conv_layer_forward.1} parent=55 // pred_check
        %p413 = pneg %p120
      $region58: #{conv_layer_forward.1} parent=55 // pred_check_branch
        %415 = sbr.rel (%p413) target = $region60
      $region59: #{conv_layer_forward.1} parent=55 // pred_region
        %s416 = smul.u32 %s21, %s20
        %s417 = smul.u32 4, %s416
        %p418 = scmp.lt.s32.totalorder %s417, 3
        %s419 = scalar_select %p418, %s417, 3
        %s420 = smul.addr %s419, 8
        %s421 = scalar_lea.vmem %s3, %s420
      $region60: #{conv_layer_forward.1} parent=55 // pred_fallthru
        _
    $region56: #{conv_layer_forward.1} parent=5 // pred_fallthru
      _
  $region6: #{conv_layer_forward.1} parent=0 // loop_footer
    %s13 = sadd.s32 1, %s9
  $region7: #{conv_layer_forward.1} parent=0 // loop_footer_branch
    %8 = sbr.rel target = $region3
  $region8: #{conv_layer_forward.1} parent=0 // loop_exit
    _

</llo_original>
